<compile_context>
chip_gen: v5e
topology: v5e:2x2
jax: 0.10.0
libtpu: 0.0.40
codegen_flags: <defaults>
</compile_context>

<pallas_src>
import functools

import jax
import jax.numpy as jnp
from jax.experimental import pallas as pl
from jax.experimental.pallas import tpu as pltpu


def _round_down(a, b):
    return (a // b) * b


def _device_info():
    """(multi_tensorcore, vmem_capacity_bytes) with conservative fallbacks."""
    try:
        kind = jax.devices()[0].device_kind.lower()
    except Exception:  # pragma: no cover - CPU/interpret fallback
        kind = ""
    multi_tc = "v7" in kind  # v7x: 2 TensorCores per chip, 64 MiB VMEM per TC
    vmem_bytes = None
    try:
        info = pltpu.get_tpu_info()
        vmem_bytes = getattr(info, "vmem_capacity_bytes", None)
    except Exception:
        vmem_bytes = None
    if not vmem_bytes:
        vmem_bytes = (64 if multi_tc else 128) * 1024 * 1024
    return multi_tc, int(vmem_bytes)


def _simam_kernel(x_ref, o_ref, *, inv_hw, inv_n, e_lambda):
    """One (row_block, hw) tile: rows are (b, c) channels, lanes are H*W."""
    x = x_ref[...]

    # Apply-path dtype: keep bf16/f16 packed on the VPU, use f32 otherwise.
    if x.dtype in (jnp.dtype(jnp.bfloat16), jnp.dtype(jnp.float16)):
        compute_dtype = x.dtype
    else:
        compute_dtype = jnp.float32
    xc = x.astype(compute_dtype)

    # Per-row mean, accumulated in f32 regardless of input dtype.
    sx = jnp.sum(x, axis=-1, keepdims=True, dtype=jnp.float32)      # (rb, 1)
    mu32 = sx * inv_hw
    mu = mu32.astype(compute_dtype)

    # Two-pass variance sum from the VMEM-resident tile (no cancellation).
    d = xc - mu
    dd = d * d
    s = jnp.sum(dd, axis=-1, keepdims=True, dtype=jnp.float32)       # (rb, 1)

    denom = 4.0 * (s * inv_n + e_lambda)                             # (rb, 1)
    # Per-row reciprocal: the per-element divide becomes a broadcast multiply.
    inv_denom = pl.reciprocal(denom, approx=False).astype(compute_dtype)

    y = dd * inv_denom + 0.5
    attn = jax.nn.sigmoid(y)                                         # 1 EUP op/elem

    o_ref[...] = (xc * attn).astype(o_ref.dtype)


def simam(x, e_lambda=1e-4, row_block=None):
    """SimAM forward. x: NCHW array [B, C, H, W]."""
    b, c, h, w = x.shape
    hw = h * w
    n = hw - 1
    rows = b * c

    itemsize = jnp.dtype(x.dtype).itemsize
    compute_itemsize = itemsize if itemsize < 4 else 4
    sublane = max(8, 32 // itemsize)        # 8 for f32, 16 for bf16, 32 for i8

    multi_tc, vmem_bytes = _device_info()
    vmem_budget = min(int(vmem_bytes * 0.75), 96 * 1024 * 1024)

    if row_block is None:
        # Size the block on IO bytes per grid step (not f32 working-tile bytes).
        target_io = (6 if multi_tc else 10) * 1024 * 1024
        row_block = max(sublane,
                        _round_down(target_io // max(hw * itemsize, 1), sublane))

        if multi_tc:
            # Keep >= 4 grid steps (when rows permit) so the "parallel" axis
            # can shard across v7x's two TensorCores.
            cap = max(sublane, _round_down(pl.cdiv(rows, 4), sublane))
            row_block = min(row_block, cap)

        # Respect the VMEM budget: 2x double-buffered input + 2x output tiles
        # plus ~3 compute-dtype temporaries per step.
        per_row_bytes = hw * (4 * itemsize + 3 * compute_itemsize)
        max_rows_fit = max(sublane,
                           _round_down(vmem_budget // max(per_row_bytes, 1), sublane))
        row_block = min(row_block, max_rows_fit)
        # TODO(synk): for very large H*W (single sublane-height tile still over
        # budget) switch to a two-pass hw-tiled grid (stats pass + apply pass).

    row_block = max(sublane, _round_down(int(row_block), sublane))
    if row_block >= rows:
        row_block = rows            # single full-array block (any size allowed)
    grid = pl.cdiv(rows, row_block)

    x2d = x.reshape(rows, hw)       # free view reshape, no copy / no padding

    kernel = functools.partial(
        _simam_kernel,
        inv_hw=1.0 / float(hw),
        inv_n=1.0 / float(max(n, 1)),   # 1x1 spatial (n=0): reference divides
                                        # by zero; we intentionally diverge.
        e_lambda=float(e_lambda),
    )

    out2d = pl.pallas_call(
        kernel,
        out_shape=jax.ShapeDtypeStruct((rows, hw), x.dtype),
        grid_spec=pltpu.PrefetchScalarGridSpec(
            num_scalar_prefetch=0,
            grid=(grid,),
            in_specs=[pl.BlockSpec((row_block, hw), lambda i: (i, 0))],
            out_specs=pl.BlockSpec((row_block, hw), lambda i: (i, 0)),
        ),
        compiler_params=pltpu.CompilerParams(
            dimension_semantics=("parallel",),
            vmem_limit_bytes=int(vmem_budget),
        ),
    )(x2d)

    return out2d.reshape(b, c, h, w)


def simam_reference(x, e_lambda=1e-4):
    """Pure-JAX reference mirroring the PyTorch forward."""
    b, c, h, w = x.shape
    n = h * w - 1
    mu = jnp.mean(x, axis=(2, 3), keepdims=True)
    d = (x - mu) ** 2
    y = d / (4.0 * (jnp.sum(d, axis=(2, 3), keepdims=True) / n + e_lambda)) + 0.5
    return x * jax.nn.sigmoid(y)


if __name__ == "__main__":
    key = jax.random.PRNGKey(0)

    # Primary test: [B=2, C=4, H=16, W=16] (f32).
    x = jax.random.normal(key, (2, 4, 16, 16), dtype=jnp.float32)
    out = jax.block_until_ready(simam(x, e_lambda=1e-4))
    ref = simam_reference(x, e_lambda=1e-4)
    assert out.shape == ref.shape and out.dtype == ref.dtype
    assert jnp.allclose(out, ref, atol=1e-5, rtol=1e-5), "mismatch vs reference"

    # Ragged shape (7x7 spatial, odd channel count) exercises partial blocks
    # and the non-multiple-of-128 lane extent without any wrapper padding.
    x2 = jax.random.normal(jax.random.PRNGKey(0), (2, 3, 7, 7), dtype=jnp.float32)
    out2 = jax.block_until_ready(simam(x2, e_lambda=1e-4))
    ref2 = simam_reference(x2, e_lambda=1e-4)
    assert jnp.allclose(out2, ref2, atol=1e-5, rtol=1e-5), "mismatch (ragged path)"

    # bf16 smoke test: apply math stays in bf16, stats in f32.
    xb = jax.random.normal(jax.random.PRNGKey(0), (2, 4, 16, 16), dtype=jnp.bfloat16)
    outb = jax.block_until_ready(simam(xb, e_lambda=1e-4))
    refb = simam_reference(xb.astype(jnp.float32), e_lambda=1e-4)
    assert outb.dtype == jnp.bfloat16
    assert jnp.allclose(outb.astype(jnp.float32), refb, atol=0.1, rtol=0.1), \
        "mismatch (bf16 path)"

    print("KERNEL_OK")
</pallas_src>

<mosaic_0001>
module attributes {stable_mosaic.version = 11 : i64} {
  func.func @_simam_kernel(%arg0: i32, %arg1: memref<8x256xf32, #tpu.memory_space<vmem>>, %arg2: memref<8x256xf32, #tpu.memory_space<vmem>>) attributes {dimension_semantics = [#tpu.dimension_semantics<parallel>], iteration_bounds = array<i64: 1>, scalar_prefetch = 0 : i64, scratch_operands = 0 : i64, tpu.core_type = #tpu.core_type<tc>, window_params = [{transform_indices = @transform_0, window_bounds = array<i64: 8, 256>}, {transform_indices = @transform_1, window_bounds = array<i64: 8, 256>}]} {
    %c0 = arith.constant 0 : index
    %c0_0 = arith.constant 0 : index
    %0 = vector.load %arg1[%c0, %c0_0] : memref<8x256xf32, #tpu.memory_space<vmem>>, vector<8x256xf32>
    %cst = arith.constant dense<0.000000e+00> : vector<8xf32>
    %1 = vector.multi_reduction <add>, %0, %cst [1] : vector<8x256xf32> to vector<8xf32>
    %2 = vector.shape_cast %1 : vector<8xf32> to vector<8x1xf32>
    %cst_1 = arith.constant 3.906250e-03 : f32
    %3 = vector.broadcast %cst_1 : f32 to vector<8x1xf32>
    %4 = arith.mulf %2, %3 : vector<8x1xf32>
    %5 = vector.broadcast %4 : vector<8x1xf32> to vector<8x256xf32>
    %6 = arith.subf %0, %5 : vector<8x256xf32>
    %7 = arith.mulf %6, %6 : vector<8x256xf32>
    %cst_2 = arith.constant dense<0.000000e+00> : vector<8xf32>
    %8 = vector.multi_reduction <add>, %7, %cst_2 [1] : vector<8x256xf32> to vector<8xf32>
    %9 = vector.shape_cast %8 : vector<8xf32> to vector<8x1xf32>
    %cst_3 = arith.constant 0.00392156886 : f32
    %10 = vector.broadcast %cst_3 : f32 to vector<8x1xf32>
    %11 = arith.mulf %9, %10 : vector<8x1xf32>
    %cst_4 = arith.constant 9.99999974E-5 : f32
    %12 = vector.broadcast %cst_4 : f32 to vector<8x1xf32>
    %13 = arith.addf %11, %12 : vector<8x1xf32>
    %cst_5 = arith.constant 4.000000e+00 : f32
    %14 = vector.broadcast %cst_5 : f32 to vector<8x1xf32>
    %15 = arith.mulf %14, %13 : vector<8x1xf32>
    %16 = tpu.reciprocal %15 : vector<8x1xf32> -> vector<8x1xf32>
    %17 = vector.broadcast %16 : vector<8x1xf32> to vector<8x256xf32>
    %18 = arith.mulf %7, %17 : vector<8x256xf32>
    %cst_6 = arith.constant 5.000000e-01 : f32
    %19 = vector.broadcast %cst_6 : f32 to vector<8x256xf32>
    %20 = arith.addf %18, %19 : vector<8x256xf32>
    %21 = arith.negf %20 : vector<8x256xf32>
    %22 = math.exp %21 : vector<8x256xf32>
    %cst_7 = arith.constant 1.000000e+00 : f32
    %23 = vector.broadcast %cst_7 : f32 to vector<8x256xf32>
    %24 = arith.addf %23, %22 : vector<8x256xf32>
    %25 = arith.divf %23, %24 : vector<8x256xf32>
    %26 = arith.mulf %0, %25 : vector<8x256xf32>
    %c0_8 = arith.constant 0 : index
    %c0_9 = arith.constant 0 : index
    %27 = vector.load %arg2[%c0_8, %c0_9] : memref<8x256xf32, #tpu.memory_space<vmem>>, vector<8x256xf32>
    tpu.vector_store %arg2[%c0_8, %c0_9], %26 {strides = array<i32>} : memref<8x256xf32, #tpu.memory_space<vmem>>, vector<8x256xf32>,
    return
  }
  func.func @transform_0(%arg0: i32) -> (i32, i32) {
    %c0_i32 = arith.constant 0 : i32
    %c0_i32_0 = arith.constant 0 : i32
    return %arg0, %c0_i32 : i32, i32
  }
  func.func @transform_1(%arg0: i32) -> (i32, i32) {
    %c0_i32 = arith.constant 0 : i32
    %c0_i32_0 = arith.constant 0 : i32
    return %arg0, %c0_i32 : i32, i32
  }
}

</mosaic_0001>

<llo_original>
// kernel: tpu_custom_call.1
$region0: #{tpu_custom_call.1}
  #allocation0 [shape = 'u32[]', space=smem, size = 0x4, offset = 0x4, fixed_abs, tag = 'smem constant byte address 0x4 - core index']
  #allocation1 [shape = 'u32[72,128]{1,0:T(1,128)}', space=vmem, size = 0x9000, scoped, tag = 'internal scratch']
  %s0 = inlined_call_operand.hbm [shape: f32[8,256], index: 0, kind: input, shape index: {}]
  %s1 = inlined_call_operand.hbm [shape: f32[8,256], index: 1, kind: output, shape index: {}]
  %s2 = sld [smem:[#allocation0]]
  $region18: #{tpu_custom_call.1} parent=0
    _
  %s4 = ssub.s32 1, %s2
  %s5 = scalar_select 0, %s4, %s2
  $region1: #{tpu_custom_call.1} parent=0
    #allocation2 [shape = 'u8[8192]{0}', space=vmem, size = 0x2000, scoped, tag = 'input window, operand 0, single buffered']
    #allocation3 [shape = 's32[1]{0}', space=sflag, size = 0x4, scoped, tag = 'scoped memory for tpu_custom_call.1']
    #allocation4 [shape = 's32[1]{0}', space=sflag, size = 0x4, scoped, tag = 'scoped memory for tpu_custom_call.1']
    #allocation5 [shape = 'u8[8192]{0}', space=vmem, size = 0x2000, scoped, tag = 'output window, operand 0, single buffered']
    %6 = vsyncpa [#allocation3], 0
    %7 = vsyncpa [#allocation4], 0
    // Predicated region
    $region2: #{tpu_custom_call.1} parent=1 // pred_check
      _
    $region3: #{tpu_custom_call.1} parent=1 // pred_check_branch
      %9 = sbr.rel (0) target = $region5
    $region4: #{tpu_custom_call.1} parent=1 // pred_region
      %11 = vsyncadd [#allocation3], 0
      %s13 = sshll.u32 %s0, 4
      %s14 = int_to_ptr.hbm [resolvable:$true] %s13
      %s15 = sshll.u32 [#allocation2], 4
      %s16 = int_to_ptr.vmem [resolvable:$true] %s15
      %18 = dma.hbm_to_vmem [thread:$0]  %s14, 256, %s16, [#allocation3]
    $region5: #{tpu_custom_call.1} parent=1 // pred_fallthru
      _
    // Predicated region
    $region6: #{tpu_custom_call.1} parent=1 // pred_check
      _
    $region7: #{tpu_custom_call.1} parent=1 // pred_check_branch
      %20 = sbr.rel (0) target = $region9
    $region8: #{tpu_custom_call.1} parent=1 // pred_region
      %22 = dma.done [#allocation3], 256
    $region9: #{tpu_custom_call.1} parent=1 // pred_fallthru
      _
    %v23 = vld [vmem:[#allocation2] sm:$0xff]
    %v24 = vld [vmem:[#allocation2 + $0x8] sm:$0xff]
    %v25 = vadd.f32 %v23, %v24
    %26 = vadd.xlane.f32.xlu0 %v25
    %v27 = vpop.xlane.xlu0 %26
    %v28 = vmul.f32 %v27, 0.00390625
    %v29 = vsub.f32 %v23, %v28
    %v30 = vsub.f32 %v24, %v28
    %v31 = vmul.f32 %v29, %v29
    %v32 = vmul.f32 %v30, %v30
    %v33 = vadd.f32 %v31, %v32
    %34 = vadd.xlane.f32.xlu0 %v33
    %v35 = vpop.xlane.xlu0 %34
    %v36 = vmul.f32 %v35, 0.003921569
    %v37 = vadd.f32 %v36, 0.0001
    %v38 = vmul.f32 %v37, 4.0
    %v39 = vrcp.pop %v38
    %v40 = vmul.f32 %v38, %v39
    %v41 = vsub.f32 1.0, %v40
    %v42 = vmul.f32 %v39, %v41
    %v43 = vadd.f32 %v39, %v42
    %vm44 = vweird.f32 %v38
    %vm45 = vweird.f32 %v39
    %vm46 = vmor %vm44, %vm45
    %v47 = vsel %vm46, %v39, %v43
    %v48 = vand.u32 2147483647, %v38
    %vm49 = vcmp.eq.f32.partialorder %v48, 8.507059e+37
    %v50 = vand.u32 %v38, 2147483648
    %v51 = vor.u32 1.1754944e-38, %v50
    %v52 = vsel %vm49, %v51, %v47
    %v53 = vmul.f32 %v31, %v52
    %v54 = vmul.f32 %v32, %v52
    %v55 = vadd.f32 %v53, 0.5
    %v56 = vadd.f32 %v54, 0.5
    %v57 = vxor.u32 %v55, 2147483648
    %v58 = vxor.u32 %v56, 2147483648
    %v59 = vmul.f32 %v57, 1.442695
    %v60 = vpow.pop %v59
    %v61 = vmul.f32 %v58, 1.442695
    %v62 = vpow.pop %v61
    %v63 = vadd.f32 %v60, 1.0
    %v64 = vadd.f32 %v62, 1.0
    %v65 = vrcp.pop %v63
    %v66 = vmul.f32 %v63, %v65
    %v67 = vsub.f32 1.0, %v66
    %v68 = vmul.f32 %v65, %v67
    %v69 = vadd.f32 %v65, %v68
    %vm70 = vweird.f32 %v63
    %vm71 = vweird.f32 %v65
    %vm72 = vmor %vm70, %vm71
    %v73 = vsel %vm72, %v65, %v69
    %v74 = vand.u32 2147483647, %v63
    %vm75 = vcmp.eq.f32.partialorder %v74, 8.507059e+37
    %v76 = vand.u32 %v63, 2147483648
    %v77 = vor.u32 1.1754944e-38, %v76
    %v78 = vsel %vm75, %v77, %v73
    %v79 = vmul.f32 1.0, %v78
    %v80 = vrcp.pop %v64
    %v81 = vmul.f32 %v64, %v80
    %v82 = vsub.f32 1.0, %v81
    %v83 = vmul.f32 %v80, %v82
    %v84 = vadd.f32 %v80, %v83
    %vm85 = vweird.f32 %v64
    %vm86 = vweird.f32 %v80
    %vm87 = vmor %vm85, %vm86
    %v88 = vsel %vm87, %v80, %v84
    %v89 = vand.u32 2147483647, %v64
    %vm90 = vcmp.eq.f32.partialorder %v89, 8.507059e+37
    %v91 = vand.u32 %v64, 2147483648
    %v92 = vor.u32 1.1754944e-38, %v91
    %v93 = vsel %vm90, %v92, %v88
    %v94 = vmul.f32 1.0, %v93
    %v95 = vmul.f32 %v23, %v79
    %v96 = vmul.f32 %v24, %v94
    %97 = vst [vmem:[#allocation5] sm:$0xff] %v95
    %98 = vst [vmem:[#allocation5 + $0x8] sm:$0xff] %v96
    // Predicated region
    $region10: #{tpu_custom_call.1} parent=1 // pred_check
      _
    $region11: #{tpu_custom_call.1} parent=1 // pred_check_branch
      %100 = sbr.rel (0) target = $region13
    $region12: #{tpu_custom_call.1} parent=1 // pred_region
      %102 = vsyncadd [#allocation4], 0
      %s104 = sshll.u32 [#allocation5], 4
      %s105 = int_to_ptr.vmem [resolvable:$true] %s104
      %s106 = sshll.u32 %s1, 4
      %s107 = int_to_ptr.hbm [resolvable:$true] %s106
      %109 = dma.vmem_to_hbm [thread:$0]  %s105, 256, %s107, [#allocation4]
    $region13: #{tpu_custom_call.1} parent=1 // pred_fallthru
      _
    // Predicated region
    $region14: #{tpu_custom_call.1} parent=1 // pred_check
      _
    $region15: #{tpu_custom_call.1} parent=1 // pred_check_branch
      %111 = sbr.rel (0) target = $region17
    $region16: #{tpu_custom_call.1} parent=1 // pred_region
      %113 = dma.done [#allocation4], 256
    $region17: #{tpu_custom_call.1} parent=1 // pred_fallthru
      _
    %114 = vsyncpa [#allocation3], 1
    %115 = vsyncpa [#allocation4], 1

</llo_original>
